<compile_context>
chip_gen: v6e
topology: v6e:2x2x1
jax: 0.10.0
libtpu: 0.0.40
codegen_flags: <defaults>
</compile_context>

<pallas_src>
import functools

import jax
import jax.numpy as jnp
from jax import lax
from jax.experimental import pallas as pl
from jax.experimental.pallas import tpu as pltpu


def _round_up(x, m):
    return ((x + m - 1) // m) * m


def _pick_tile_b(b, c, itemsize):
    # Keep the double-buffered logits tile <= ~8 MiB so it fits comfortably in
    # scoped VMEM on every TPU generation.
    vmem_budget = 8 * 1024 * 1024
    cap = max(8, vmem_budget // max(1, 2 * c * itemsize))
    cap = max(8, (cap // 8) * 8)
    tile = min(_round_up(b, 8), 512, cap)
    return max(8, _round_up(tile, 8))


def _dla_loss_kernel(logits_ref, targets_ref, out_ref, acc_ce_ref, acc_h_ref,
                     *, lambda1, lambda2, batch, tile_b):
    i = pl.program_id(0)
    n = pl.num_programs(0)

    @pl.when(i == 0)
    def _init():
        acc_ce_ref[...] = jnp.zeros_like(acc_ce_ref)
        acc_h_ref[...] = jnp.zeros_like(acc_h_ref)

    # Stream in native dtype, upcast to f32 in-kernel (bf16 halves HBM traffic).
    logits = logits_ref[...].astype(jnp.float32)           # (TILE_B, C)
    targets = targets_ref[...]                              # (TILE_B, 1) i32
    tb, c = logits.shape

    # Mask for batch-padding rows (when B % TILE_B != 0).
    row_ids = i * tile_b + lax.broadcasted_iota(jnp.int32, (tb, 1), 0)
    valid = (row_ids < batch).astype(jnp.float32)            # (TILE_B, 1)

    # one-hot(targets) via iota + compare (VPU select, no gather needed).
    class_ids = lax.broadcasted_iota(jnp.int32, (tb, c), 1)
    onehot = (class_ids == targets).astype(jnp.float32)      # (TILE_B, C)

    # Numerically-stable log-sum-exp over the class (lane) axis.
    m = jnp.max(logits, axis=1, keepdims=True)                # (TILE_B, 1)
    exps = jnp.exp(logits - m)                                # (TILE_B, C)
    sumexp = jnp.sum(exps, axis=1, keepdims=True)             # (TILE_B, 1)
    lse = m + jnp.log(sumexp)                                 # (TILE_B, 1)

    # loss1 per-row partial: lse_i - logit[i, target_i], padded rows masked.
    target_logit = jnp.sum(onehot * logits, axis=1, keepdims=True)
    ce_rows = valid * (lse - target_logit)                     # (TILE_B, 1)

    # loss2 per-row partial: max softmax prob = exp(m - lse) = 1 / sumexp
    # (exact), hinged against the raw logits, summed over classes.
    max_prob = pl.reciprocal(sumexp, approx=False)             # (TILE_B, 1)
    hinge = jnp.maximum(max_prob - logits, 0.0)                # (TILE_B, C)
    hinge_rows = valid * jnp.sum(hinge, axis=1, keepdims=True)  # (TILE_B, 1)

    # Per-row accumulation only (no sublane reduce inside the hot loop).
    acc_ce_ref[...] += ce_rows
    acc_h_ref[...] += hinge_rows

    @pl.when(i == n - 1)
    def _finish():
        inv_b = jnp.float32(1.0 / batch)
        ce_sum = jnp.sum(acc_ce_ref[...], axis=0, keepdims=True)   # (1, 1)
        h_sum = jnp.sum(acc_h_ref[...], axis=0, keepdims=True)     # (1, 1)
        out_ref[...] = (lambda1 * ce_sum + lambda2 * h_sum) * inv_b


def dla_loss(logits, targets, lambda1=0.5, lambda2=0.5, tile_b=None):
    B, C = logits.shape
    itemsize = jnp.dtype(logits.dtype).itemsize
    if tile_b is None:
        tile_b = _pick_tile_b(B, C, itemsize)
    tile_b = max(8, _round_up(int(tile_b), 8))
    b_pad = _round_up(B, tile_b)
    num_tiles = b_pad // tile_b

    if b_pad != B:
        logits = jnp.pad(logits, ((0, b_pad - B), (0, 0)))
        targets = jnp.pad(targets, ((0, b_pad - B),))
    targets_2d = targets.reshape(b_pad, 1).astype(jnp.int32)

    kernel = functools.partial(
        _dla_loss_kernel,
        lambda1=float(lambda1), lambda2=float(lambda2),
        batch=int(B), tile_b=int(tile_b))

    out = pl.pallas_call(
        kernel,
        out_shape=jax.ShapeDtypeStruct((1, 1), jnp.float32),
        grid_spec=pltpu.PrefetchScalarGridSpec(
            num_scalar_prefetch=0,
            grid=(num_tiles,),
            in_specs=[
                pl.BlockSpec((tile_b, C), lambda i: (i, 0)),
                pl.BlockSpec((tile_b, 1), lambda i: (i, 0)),
            ],
            out_specs=pl.BlockSpec((1, 1), lambda i: (0, 0)),
            scratch_shapes=[pltpu.VMEM((tile_b, 1), jnp.float32),
                            pltpu.VMEM((tile_b, 1), jnp.float32)],
        ),
        compiler_params=pltpu.CompilerParams(
            dimension_semantics=("arbitrary",)),
    )(logits, targets_2d)
    return out[0, 0]


def _dla_loss_ref(logits, targets, lambda1=0.5, lambda2=0.5):
    # Pure-JAX reference mirroring the PyTorch module.
    softmax_logits = jax.nn.softmax(logits, axis=1)
    log_softmax = jax.nn.log_softmax(logits, axis=1)
    B = logits.shape[0]
    nll = -jnp.take_along_axis(log_softmax, targets.reshape(B, 1), axis=1)
    loss1 = jnp.mean(nll)
    max_logit = jnp.max(softmax_logits, axis=1, keepdims=True)
    loss2 = jnp.mean(jnp.sum(jnp.maximum(max_logit - logits, 0.0), axis=1))
    return lambda1 * loss1 + lambda2 * loss2


if __name__ == "__main__":
    key = jax.random.PRNGKey(0)
    k1, k2, k3, k4 = jax.random.split(key, 4)

    # 1) float32 inputs, batch exactly one tile.
    B, C = 8, 32
    logits = jax.random.normal(k1, (B, C), dtype=jnp.float32)
    targets = jax.random.randint(k2, (B,), 0, C, dtype=jnp.int32)
    loss = jax.block_until_ready(dla_loss(logits, targets))
    ref = _dla_loss_ref(logits, targets)
    assert jnp.allclose(loss, ref, rtol=1e-5, atol=1e-5), (loss, ref)

    # 2) bf16 inputs streamed natively, upcast in-kernel.
    logits_bf16 = logits.astype(jnp.bfloat16)
    loss_bf16 = jax.block_until_ready(dla_loss(logits_bf16, targets))
    ref_bf16 = _dla_loss_ref(logits_bf16.astype(jnp.float32), targets)
    assert jnp.allclose(loss_bf16, ref_bf16, rtol=1e-5, atol=1e-5), (loss_bf16, ref_bf16)

    # 3) uneven batch -> multi-tile grid + padding mask + carried accumulators.
    B2, C2 = 20, 32
    logits2 = jax.random.normal(k3, (B2, C2), dtype=jnp.float32)
    targets2 = jax.random.randint(k4, (B2,), 0, C2, dtype=jnp.int32)
    loss2 = jax.block_until_ready(dla_loss(logits2, targets2, tile_b=8))
    ref2 = _dla_loss_ref(logits2, targets2)
    assert jnp.allclose(loss2, ref2, rtol=1e-5, atol=1e-5), (loss2, ref2)

    print("KERNEL_OK")
</pallas_src>

<mosaic_0001>
module attributes {stable_mosaic.version = 11 : i64} {
  func.func @_dla_loss_kernel(%arg0: i32, %arg1: memref<8x32xf32, #tpu.memory_space<vmem>>, %arg2: memref<8x1xi32, #tpu.memory_space<vmem>>, %arg3: memref<1x1xf32, #tpu.memory_space<vmem>>, %arg4: memref<8x1xf32, #tpu.memory_space<vmem>>, %arg5: memref<8x1xf32, #tpu.memory_space<vmem>>) attributes {dimension_semantics = [#tpu.dimension_semantics<arbitrary>], iteration_bounds = array<i64: 1>, scalar_prefetch = 0 : i64, scratch_operands = 2 : i64, tpu.core_type = #tpu.core_type<tc>, window_params = [{transform_indices = @transform_0, window_bounds = array<i64: 8, 32>}, {transform_indices = @transform_1, window_bounds = array<i64: 8, 1>}, {pipeline_mode = #tpu.pipeline_mode<synchronous>, transform_indices = @transform_2, window_bounds = array<i64: 1, 1>}]} {
    %c0_i32 = arith.constant 0 : i32
    %0 = arith.cmpi eq, %arg0, %c0_i32 : i32
    %1 = arith.extui %0 : i1 to i32
    %c0_i32_0 = arith.constant 0 : i32
    %2 = arith.cmpi ne, %1, %c0_i32_0 : i32
    scf.if %2 {
      %cst_19 = arith.constant 0.000000e+00 : f32
      %49 = vector.broadcast %cst_19 : f32 to vector<8x1xf32>
      %c0_20 = arith.constant 0 : index
      %c0_21 = arith.constant 0 : index
      %50 = vector.load %arg4[%c0_20, %c0_21] : memref<8x1xf32, #tpu.memory_space<vmem>>, vector<8x1xf32>
      tpu.vector_store %arg4[%c0_20, %c0_21], %49 {strides = array<i32>} : memref<8x1xf32, #tpu.memory_space<vmem>>, vector<8x1xf32>,
      %cst_22 = arith.constant 0.000000e+00 : f32
      %51 = vector.broadcast %cst_22 : f32 to vector<8x1xf32>
      %c0_23 = arith.constant 0 : index
      %c0_24 = arith.constant 0 : index
      %52 = vector.load %arg5[%c0_23, %c0_24] : memref<8x1xf32, #tpu.memory_space<vmem>>, vector<8x1xf32>
      tpu.vector_store %arg5[%c0_23, %c0_24], %51 {strides = array<i32>} : memref<8x1xf32, #tpu.memory_space<vmem>>, vector<8x1xf32>,
    } else {
    }
    %c0 = arith.constant 0 : index
    %c0_1 = arith.constant 0 : index
    %3 = vector.load %arg1[%c0, %c0_1] : memref<8x32xf32, #tpu.memory_space<vmem>>, vector<8x32xf32>
    %c0_2 = arith.constant 0 : index
    %c0_3 = arith.constant 0 : index
    %4 = vector.load %arg2[%c0_2, %c0_3] : memref<8x1xi32, #tpu.memory_space<vmem>>, vector<8x1xi32>
    %c8_i32 = arith.constant 8 : i32
    %5 = arith.muli %arg0, %c8_i32 : i32
    %6 = tpu.iota {dimensions = array<i32: 0>} : vector<8x1xi32>
    %7 = vector.broadcast %5 : i32 to vector<8x1xi32>
    %8 = arith.addi %7, %6 : vector<8x1xi32>
    %c8_i32_4 = arith.constant 8 : i32
    %9 = vector.broadcast %c8_i32_4 : i32 to vector<8x1xi32>
    %10 = arith.cmpi slt, %8, %9 : vector<8x1xi32>
    %11 = arith.extui %10 : vector<8x1xi1> to vector<8x1xi32>
    %12 = arith.sitofp %11 : vector<8x1xi32> to vector<8x1xf32>
    %13 = tpu.iota {dimensions = array<i32: 1>} : vector<8x32xi32>
    %14 = vector.broadcast %4 : vector<8x1xi32> to vector<8x32xi32>
    %15 = arith.cmpi eq, %13, %14 : vector<8x32xi32>
    %16 = arith.extui %15 : vector<8x32xi1> to vector<8x32xi32>
    %17 = arith.sitofp %16 : vector<8x32xi32> to vector<8x32xf32>
    %cst = arith.constant dense<0xFF800000> : vector<8xf32>
    %18 = vector.multi_reduction <maximumf>, %3, %cst [1] : vector<8x32xf32> to vector<8xf32>
    %19 = vector.shape_cast %18 : vector<8xf32> to vector<8x1xf32>
    %20 = vector.broadcast %19 : vector<8x1xf32> to vector<8x32xf32>
    %21 = arith.subf %3, %20 : vector<8x32xf32>
    %22 = math.exp %21 : vector<8x32xf32>
    %cst_5 = arith.constant dense<0.000000e+00> : vector<8xf32>
    %23 = vector.multi_reduction <add>, %22, %cst_5 [1] : vector<8x32xf32> to vector<8xf32>
    %24 = vector.shape_cast %23 : vector<8xf32> to vector<8x1xf32>
    %25 = math.log %24 : vector<8x1xf32>
    %26 = arith.addf %19, %25 : vector<8x1xf32>
    %27 = arith.mulf %17, %3 : vector<8x32xf32>
    %cst_6 = arith.constant dense<0.000000e+00> : vector<8xf32>
    %28 = vector.multi_reduction <add>, %27, %cst_6 [1] : vector<8x32xf32> to vector<8xf32>
    %29 = vector.shape_cast %28 : vector<8xf32> to vector<8x1xf32>
    %30 = arith.subf %26, %29 : vector<8x1xf32>
    %31 = arith.mulf %12, %30 : vector<8x1xf32>
    %32 = tpu.reciprocal %24 : vector<8x1xf32> -> vector<8x1xf32>
    %33 = vector.broadcast %32 : vector<8x1xf32> to vector<8x32xf32>
    %34 = arith.subf %33, %3 : vector<8x32xf32>
    %cst_7 = arith.constant 0.000000e+00 : f32
    %35 = vector.broadcast %cst_7 : f32 to vector<8x32xf32>
    %36 = arith.maximumf %34, %35 : vector<8x32xf32>
    %cst_8 = arith.constant dense<0.000000e+00> : vector<8xf32>
    %37 = vector.multi_reduction <add>, %36, %cst_8 [1] : vector<8x32xf32> to vector<8xf32>
    %38 = vector.shape_cast %37 : vector<8xf32> to vector<8x1xf32>
    %39 = arith.mulf %12, %38 : vector<8x1xf32>
    %c0_9 = arith.constant 0 : index
    %c0_10 = arith.constant 0 : index
    %40 = vector.load %arg4[%c0_9, %c0_10] : memref<8x1xf32, #tpu.memory_space<vmem>>, vector<8x1xf32>
    %41 = arith.addf %40, %31 : vector<8x1xf32>
    %c0_11 = arith.constant 0 : index
    %c0_12 = arith.constant 0 : index
    %42 = vector.load %arg4[%c0_11, %c0_12] : memref<8x1xf32, #tpu.memory_space<vmem>>, vector<8x1xf32>
    tpu.vector_store %arg4[%c0_11, %c0_12], %41 {strides = array<i32>} : memref<8x1xf32, #tpu.memory_space<vmem>>, vector<8x1xf32>,
    %c0_13 = arith.constant 0 : index
    %c0_14 = arith.constant 0 : index
    %43 = vector.load %arg5[%c0_13, %c0_14] : memref<8x1xf32, #tpu.memory_space<vmem>>, vector<8x1xf32>
    %44 = arith.addf %43, %39 : vector<8x1xf32>
    %c0_15 = arith.constant 0 : index
    %c0_16 = arith.constant 0 : index
    %45 = vector.load %arg5[%c0_15, %c0_16] : memref<8x1xf32, #tpu.memory_space<vmem>>, vector<8x1xf32>
    tpu.vector_store %arg5[%c0_15, %c0_16], %44 {strides = array<i32>} : memref<8x1xf32, #tpu.memory_space<vmem>>, vector<8x1xf32>,
    %c0_i32_17 = arith.constant 0 : i32
    %46 = arith.cmpi eq, %arg0, %c0_i32_17 : i32
    %47 = arith.extui %46 : i1 to i32
    %c0_i32_18 = arith.constant 0 : i32
    %48 = arith.cmpi ne, %47, %c0_i32_18 : i32
    scf.if %48 {
      %c0_19 = arith.constant 0 : index
      %c0_20 = arith.constant 0 : index
      %49 = vector.load %arg4[%c0_19, %c0_20] : memref<8x1xf32, #tpu.memory_space<vmem>>, vector<8x1xf32>
      %cst_21 = arith.constant dense<0.000000e+00> : vector<1xf32>
      %50 = vector.multi_reduction <add>, %49, %cst_21 [0] : vector<8x1xf32> to vector<1xf32>
      %51 = vector.shape_cast %50 : vector<1xf32> to vector<1x1xf32>
      %c0_22 = arith.constant 0 : index
      %c0_23 = arith.constant 0 : index
      %52 = vector.load %arg5[%c0_22, %c0_23] : memref<8x1xf32, #tpu.memory_space<vmem>>, vector<8x1xf32>
      %cst_24 = arith.constant dense<0.000000e+00> : vector<1xf32>
      %53 = vector.multi_reduction <add>, %52, %cst_24 [0] : vector<8x1xf32> to vector<1xf32>
      %54 = vector.shape_cast %53 : vector<1xf32> to vector<1x1xf32>
      %cst_25 = arith.constant 5.000000e-01 : f32
      %55 = vector.broadcast %cst_25 : f32 to vector<1x1xf32>
      %56 = arith.mulf %55, %51 : vector<1x1xf32>
      %cst_26 = arith.constant 5.000000e-01 : f32
      %57 = vector.broadcast %cst_26 : f32 to vector<1x1xf32>
      %58 = arith.mulf %57, %54 : vector<1x1xf32>
      %59 = arith.addf %56, %58 : vector<1x1xf32>
      %cst_27 = arith.constant 1.250000e-01 : f32
      %60 = vector.broadcast %cst_27 : f32 to vector<1x1xf32>
      %61 = arith.mulf %59, %60 : vector<1x1xf32>
      %c0_28 = arith.constant 0 : index
      %c0_29 = arith.constant 0 : index
      %62 = vector.load %arg3[%c0_28, %c0_29] : memref<1x1xf32, #tpu.memory_space<vmem>>, vector<1x1xf32>
      tpu.vector_store %arg3[%c0_28, %c0_29], %61 {strides = array<i32>} : memref<1x1xf32, #tpu.memory_space<vmem>>, vector<1x1xf32>,
    } else {
    }
    return
  }
  func.func @transform_0(%arg0: i32) -> (i32, i32) {
    %c0_i32 = arith.constant 0 : i32
    %c0_i32_0 = arith.constant 0 : i32
    return %arg0, %c0_i32 : i32, i32
  }
  func.func @transform_1(%arg0: i32) -> (i32, i32) {
    %c0_i32 = arith.constant 0 : i32
    %c0_i32_0 = arith.constant 0 : i32
    return %arg0, %c0_i32 : i32, i32
  }
  func.func @transform_2(%arg0: i32) -> (i32, i32) {
    %c0_i32 = arith.constant 0 : i32
    %c0_i32_0 = arith.constant 0 : i32
    %c0_i32_1 = arith.constant 0 : i32
    return %c0_i32, %c0_i32_0 : i32, i32
  }
}

</mosaic_0001>

<llo_original>
// kernel: tpu_custom_call.1
$region0: #{tpu_custom_call.1}
  #allocation0 [shape = 'u32[]', space=smem, size = 0x4, offset = 0x4, fixed_abs, tag = 'smem constant byte address 0x4 - core index']
  #allocation1 [shape = 'u32[144,128]{1,0:T(1,128)}', space=vmem, size = 0x12000, scoped, tag = 'internal scratch']
  #allocation2 [shape = 'f32[8,1]{1,0:T(8,128)}', space=vmem, size = 0x1000, scoped, tag = 'scratch operand']
  #allocation3 [shape = 'f32[8,1]{1,0:T(8,128)}', space=vmem, size = 0x1000, scoped, tag = 'scratch operand']
  %s0 = inlined_call_operand.vmem [shape: f32[8,32], index: 0, kind: input, shape index: {}]
  %s1 = inlined_call_operand.vmem [shape: s32[8,1], index: 1, kind: input, shape index: {}]
  %s2 = inlined_call_operand.hbm [shape: f32[1,1], index: 2, kind: output, shape index: {}]
  %s3 = sld [smem:[#allocation0]]
  $region26: #{tpu_custom_call.1} parent=0
    _
  %s5 = ssub.s32 1, %s3
  %s6 = scalar_select 0, %s5, %s3
  $region1: #{tpu_custom_call.1} parent=0
    #allocation4 [shape = 'u8[512]{0}', space=vmem, size = 0x400, scoped, tag = 'output window, operand 0, single buffered']
    #allocation5 [shape = 's32[1]{0}', space=sflag, size = 0x4, scoped, tag = 'scoped memory for tpu_custom_call.1']
    %7 = vsyncpa [#allocation5], 0
    // Predicated region
    $region2: #{tpu_custom_call.1} parent=1 // pred_check
      _
    $region3: #{tpu_custom_call.1} parent=1 // pred_check_branch
      %9 = sbr.rel (0) target = $region5
    $region4: #{tpu_custom_call.1} parent=1 // pred_region
      _
    $region5: #{tpu_custom_call.1} parent=1 // pred_fallthru
      _
    // Predicated region
    $region6: #{tpu_custom_call.1} parent=1 // pred_check
      _
    $region7: #{tpu_custom_call.1} parent=1 // pred_check_branch
      %11 = sbr.rel (0) target = $region9
    $region8: #{tpu_custom_call.1} parent=1 // pred_region
      _
    $region9: #{tpu_custom_call.1} parent=1 // pred_fallthru
      _
    %p12 = scmp.eq.s32.totalorder 0, 0
    // Predicated region
    $region10: #{tpu_custom_call.1} parent=1 // pred_check
      %p13 = pneg %p12
    $region11: #{tpu_custom_call.1} parent=1 // pred_check_branch
      %15 = sbr.rel (%p13) target = $region13
    $region12: #{tpu_custom_call.1} parent=1 // pred_region
      %vm16 = vcmask 7168
      %17 = vst.msk [vmem:[#allocation2] sm:$0xff] %vm16, 0.0
      %18 = vst.msk [vmem:[#allocation3] sm:$0xff] %vm16, 0.0
    $region13: #{tpu_custom_call.1} parent=1 // pred_fallthru
      _
    %v19 = vld [vmem:[%s0] sm:$0xff]
    %v20 = vld [vmem:[%s1] sm:$0xff]
    %s21 = smul.u32 0, 8
    %v22 = vlaneseq
    %v23 = vshrl.u32 %v22, 7
    %v24 = vstv %s21
    %v25 = vadd.s32 %v24, %v23
    %vm26 = vcmp.lt.s32.totalorder %v25, 8
    %v27 = vsel %vm26, 1, 0
    %v28 = vcvt.s32.f32 %v27
    %v29 = vlaneseq
    %v30 = vand.u32 %v29, 127
    %31 = vset.pattern.permute.xlu0 0
    %32 = vperm.xlu0 %31, %v20
    %v33 = vpop.permute.xlu0 %32
    %vm34 = vcmp.eq.s32.totalorder %v30, %v33
    %v35 = vsel %vm34, 1, 0
    %v36 = vcvt.s32.f32 %v35
    %vm37 = vcmask 261120
    %v38 = vsel %vm37, %v19, -inf
    %39 = vmax.xlane.f32.xlu0 %v38
    %v40 = vpop.xlane.xlu0 %39
    %v41 = vsub.f32 %v19, %v40
    %v42 = vmul.f32 %v41, 1.442695
    %v43 = vpow.pop %v42
    %v44 = vsel %vm37, %v43, 0.0
    %45 = vadd.xlane.f32.xlu0 %v44
    %v46 = vpop.xlane.xlu0 %45
    %v47 = vlog2.pop %v46
    %v48 = vmul.f32 %v47, 0.6931472
    %v49 = vadd.f32 %v40, %v48
    %v50 = vmul.f32 %v36, %v19
    %v51 = vsel %vm37, %v50, 0.0
    %52 = vadd.xlane.f32.xlu0 %v51
    %v53 = vpop.xlane.xlu0 %52
    %v54 = vsub.f32 %v49, %v53
    %v55 = vmul.f32 %v28, %v54
    %v56 = vrcp.pop %v46
    %v57 = vsub.f32 %v56, %v19
    %v58 = vmax.f32 %v57, 0.0
    %v59 = vsel %vm37, %v58, 0.0
    %60 = vadd.xlane.f32.xlu0 %v59
    %v61 = vpop.xlane.xlu0 %60
    %v62 = vmul.f32 %v28, %v61
    %v63 = vld [vmem:[#allocation2] sm:$0xff]
    %v64 = vadd.f32 %v63, %v55
    %vm65 = vcmask 7168
    %66 = vst.msk [vmem:[#allocation2] sm:$0xff] %vm65, %v64
    %v67 = vld [vmem:[#allocation3] sm:$0xff]
    %v68 = vadd.f32 %v67, %v62
    %69 = vst.msk [vmem:[#allocation3] sm:$0xff] %vm65, %v68
    // Predicated region
    $region14: #{tpu_custom_call.1} parent=1 // pred_check
      %p70 = pneg %p12
    $region15: #{tpu_custom_call.1} parent=1 // pred_check_branch
      %72 = sbr.rel (%p70) target = $region17
    $region16: #{tpu_custom_call.1} parent=1 // pred_region
      %v73 = vld [vmem:[#allocation2] sm:$0xff]
      %v74 = vsel %vm65, %v73, 0.0
      %v75 = vrot.slane %v74, 4
      %v76 = vadd.f32 %v74, %v75
      %v77 = vrot.slane %v76, 2
      %v78 = vadd.f32 %v76, %v77
      %v79 = vrot.slane %v78, 1
      %v80 = vadd.f32 %v78, %v79
      %v81 = vld [vmem:[#allocation3] sm:$0xff]
      %v82 = vsel %vm65, %v81, 0.0
      %v83 = vrot.slane %v82, 4
      %v84 = vadd.f32 %v82, %v83
      %v85 = vrot.slane %v84, 2
      %v86 = vadd.f32 %v84, %v85
      %v87 = vrot.slane %v86, 1
      %v88 = vadd.f32 %v86, %v87
      %v89 = vmul.f32 %v80, 0.5
      %v90 = vmul.f32 %v88, 0.5
      %v91 = vadd.f32 %v89, %v90
      %v92 = vmul.f32 %v91, 0.125
      %vm93 = vcmask 0
      %94 = vst.msk [vmem:[#allocation4] sm:$0x1] %vm93, %v92
    $region17: #{tpu_custom_call.1} parent=1 // pred_fallthru
      _
    // Predicated region
    $region18: #{tpu_custom_call.1} parent=1 // pred_check
      _
    $region19: #{tpu_custom_call.1} parent=1 // pred_check_branch
      %96 = sbr.rel (0) target = $region21
    $region20: #{tpu_custom_call.1} parent=1 // pred_region
      %s98 = ssub.s32 16, 16
      %99 = vsyncadd [#allocation5], %s98
      %s101 = sshll.u32 [#allocation4], 4
      %s102 = int_to_ptr.vmem [resolvable:$true] %s101
      %104 = dma.vmem_to_hbm [thread:$0]  %s102, 16, %s2, [#allocation5]
    $region21: #{tpu_custom_call.1} parent=1 // pred_fallthru
      _
    // Predicated region
    $region22: #{tpu_custom_call.1} parent=1 // pred_check
      _
    $region23: #{tpu_custom_call.1} parent=1 // pred_check_branch
      %106 = sbr.rel (0) target = $region25
    $region24: #{tpu_custom_call.1} parent=1 // pred_region
      %107 = dma.done [#allocation5], 16
    $region25: #{tpu_custom_call.1} parent=1 // pred_fallthru
      _
    %108 = vsyncpa [#allocation5], 1

</llo_original>
